<compile_context>
chip_gen: v6e
topology: v6e:2x2x1
jax: 0.10.0
libtpu: 0.0.40
codegen_flags: <defaults>
</compile_context>

<pallas_src>
import jax
import jax.numpy as jnp
from jax.experimental import pallas as pl
from jax.experimental.pallas import tpu as pltpu


def _round_up(x, m):
    return ((x + m - 1) // m) * m


# ----------------------------------------------------------------------------
# Kernel
# ----------------------------------------------------------------------------
def mlp_kernel(x_ref, w1_ref, b1_ref, w2_ref, b2_ref, o_ref):
    # fc1: cast x to bf16 at the dot input (full-rate MXU), accumulate in f32.
    x = x_ref[...].astype(jnp.bfloat16)
    h = jnp.dot(x, w1_ref[...], preferred_element_type=jnp.float32)
    h = jnp.maximum(h + b1_ref[...], 0.0)

    # fc2: bf16 activations into the MXU, f32 accumulation + bias.
    # b2 carries -1e30 on padded output lanes, so no in-kernel masking needed.
    logits = jnp.dot(h.astype(jnp.bfloat16), w2_ref[...],
                     preferred_element_type=jnp.float32)
    logits = logits + b2_ref[...]

    # Numerically-stable softmax over the feature axis (dim=1), all in f32.
    m = jnp.max(logits, axis=-1, keepdims=True)
    e = jnp.exp(logits - m)
    denom = jnp.sum(e, axis=-1, keepdims=True)
    o_ref[...] = (e / denom).astype(o_ref.dtype)  # exact normalization


# ----------------------------------------------------------------------------
# One-time parameter preparation (pad + bf16 cast, hoisted out of the forward)
# ----------------------------------------------------------------------------
def prepare_mlp_params(w1, b1, w2, b2):
    """Pads/casts the weights once. w1: (K,H), b1: (H,), w2: (H,O), b2: (O,)."""
    K, H = w1.shape
    O = w2.shape[1]
    K_p = _round_up(K, 128)
    H_p = _round_up(H, 128)
    O_p = _round_up(O, 128)

    w1_p = jnp.zeros((K_p, H_p), jnp.bfloat16).at[:K, :H].set(w1.astype(jnp.bfloat16))
    w2_p = jnp.zeros((H_p, O_p), jnp.bfloat16).at[:H, :O].set(w2.astype(jnp.bfloat16))
    b1_p = jnp.zeros((1, H_p), jnp.float32).at[:, :H].set(jnp.reshape(b1, (1, H)))
    # Bake the padded-output-lane mask into the bias: padded logits become
    # -1e30 exactly (zero x-cols / W2-cols contribute nothing), so exp -> 0.
    b2_p = jnp.full((1, O_p), -1e30, jnp.float32).at[:, :O].set(jnp.reshape(b2, (1, O)))

    return {"w1": w1_p, "b1": b1_p, "w2": w2_p, "b2": b2_p, "dims": (K, H, O)}


def _resident_spec(shape):
    """Spec for an operand whose block is identical every grid step.

    Single-buffer it (Buffered(1)) so it does not pay 2x VMEM; falls back to
    the default if this JAX version's BlockSpec lacks pipeline_mode.
    """
    index_map = lambda i: (0,) * len(shape)
    try:
        return pl.BlockSpec(shape, index_map, pipeline_mode=pl.Buffered(1))
    except TypeError:  # pragma: no cover - older jax
        return pl.BlockSpec(shape, index_map)


# ----------------------------------------------------------------------------
# Forward pass
# ----------------------------------------------------------------------------
def mlp_forward(x, params, *, batch_tile=512):
    """out = softmax(relu(x @ w1 + b1) @ w2 + b2, axis=1), x: (B, K) f32."""
    K, H, O = params["dims"]
    w1_p, b1_p, w2_p, b2_p = params["w1"], params["b1"], params["w2"], params["b2"]
    K_p, H_p = w1_p.shape
    O_p = w2_p.shape[1]

    B = x.shape[0]
    assert x.shape[1] == K

    # Batch tile: multiple of 16 (bf16 packs 16 rows / vreg sublane group).
    TB = min(_round_up(batch_tile, 16), _round_up(B, 16))
    B_p = _round_up(B, TB)
    # Guarantee >= 2 grid steps when the batch allows it, so the "parallel"
    # batch axis actually shards across both v7x TensorCores.
    if B_p // TB < 2 and B_p >= 32:
        TB = _round_up(B_p // 2, 16)
        B_p = _round_up(B, TB)
    grid = (B_p // TB,)

    # Pad x only when mis-aligned; bf16 cast happens inside the kernel.
    if (B_p, K_p) != (B, K):
        x_in = jnp.zeros((B_p, K_p), x.dtype).at[:B, :K].set(x)
    else:
        x_in = x
    x_bytes = jnp.dtype(x_in.dtype).itemsize

    # Explicit VMEM budget: resident (single-buffered) weights + double-buffered
    # x/out streams + hidden intermediates, with ~1.5x headroom, capped at the
    # 64 MiB/TC physical limit of v7x.
    resident = w1_p.size * 2 + w2_p.size * 2 + b1_p.size * 4 + b2_p.size * 4
    streamed = 2 * TB * K_p * x_bytes + 2 * TB * O_p * 4
    scratch = TB * H_p * (4 + 2) + TB * O_p * 4
    vmem_limit = int(min(1.5 * (resident + streamed + scratch) + (2 << 20), 64 << 20))

    cost = pl.CostEstimate(
        flops=2 * B_p * K_p * H_p + 2 * B_p * H_p * O_p,
        transcendentals=B_p * O_p,
        bytes_accessed=(x_in.size * x_bytes + w1_p.size * 2 + w2_p.size * 2
                        + b1_p.size * 4 + b2_p.size * 4 + B_p * O_p * 4),
    )

    out_p = pl.pallas_call(
        mlp_kernel,
        out_shape=jax.ShapeDtypeStruct((B_p, O_p), jnp.float32),
        grid_spec=pl.GridSpec(
            grid=grid,
            in_specs=[
                pl.BlockSpec((TB, K_p), lambda i: (i, 0)),   # x: batch-tiled stream
                _resident_spec((K_p, H_p)),                  # W1: VMEM-resident, 1-buffered
                _resident_spec((1, H_p)),                    # b1
                _resident_spec((H_p, O_p)),                  # W2
                _resident_spec((1, O_p)),                    # b2 (with baked lane mask)
            ],
            out_specs=pl.BlockSpec((TB, O_p), lambda i: (i, 0)),  # lane-dense output
        ),
        compiler_params=pltpu.CompilerParams(
            dimension_semantics=("parallel",),   # megacore sharding on v7x
            vmem_limit_bytes=vmem_limit,
        ),
        cost_estimate=cost,
    )(x_in, w1_p, b1_p, w2_p, b2_p)

    return out_p[:B, :O]


def reference_mlp(x, w1, b1, w2, b2):
    h = jnp.maximum(x @ w1 + jnp.reshape(b1, (1, -1)), 0.0)
    logits = h @ w2 + jnp.reshape(b2, (1, -1))
    return jax.nn.softmax(logits, axis=1)


if __name__ == "__main__":
    # Small shapes consistent with MLP(input_size, output_size, hidden_size).
    batch, input_size, hidden_size, output_size = 8, 32, 64, 16

    key = jax.random.PRNGKey(0)
    kx, kw1, kb1, kw2, kb2 = jax.random.split(key, 5)

    x = jax.random.normal(kx, (batch, input_size), dtype=jnp.float32)

    # PyTorch-style uniform init, bound = 1/sqrt(fan_in); weights stored
    # pre-transposed as (in_features, out_features).
    bound1 = 1.0 / jnp.sqrt(input_size)
    bound2 = 1.0 / jnp.sqrt(hidden_size)
    w1 = jax.random.uniform(kw1, (input_size, hidden_size), jnp.float32, -bound1, bound1)
    b1 = jax.random.uniform(kb1, (hidden_size,), jnp.float32, -bound1, bound1)
    w2 = jax.random.uniform(kw2, (hidden_size, output_size), jnp.float32, -bound2, bound2)
    b2 = jax.random.uniform(kb2, (output_size,), jnp.float32, -bound2, bound2)

    # Pad/cast the parameters once (hoisted out of the per-call path).
    params = prepare_mlp_params(w1, b1, w2, b2)

    out = mlp_forward(x, params)
    out = jax.block_until_ready(out)

    ref = reference_mlp(x, w1, b1, w2, b2)
    assert out.shape == (batch, output_size)
    # bf16 MXU operands dominate the error vs the f32 reference.
    assert jnp.allclose(out, ref, atol=2e-2, rtol=0.0), "mismatch vs reference"
    # Exact softmax normalization (exact divide on the denominator).
    assert jnp.allclose(jnp.sum(out, axis=1), 1.0, atol=1e-3), "rows not normalized"

    print("KERNEL_OK")
</pallas_src>

<mosaic_0001>
module attributes {stable_mosaic.version = 11 : i64} {
  func.func @mlp_kernel(%arg0: i32, %arg1: memref<16x128xf32, #tpu.memory_space<vmem>>, %arg2: memref<128x128xbf16, #tpu.memory_space<vmem>>, %arg3: memref<1x128xf32, #tpu.memory_space<vmem>>, %arg4: memref<128x128xbf16, #tpu.memory_space<vmem>>, %arg5: memref<1x128xf32, #tpu.memory_space<vmem>>, %arg6: memref<16x128xf32, #tpu.memory_space<vmem>>) attributes {dimension_semantics = [#tpu.dimension_semantics<parallel>], iteration_bounds = array<i64: 1>, scalar_prefetch = 0 : i64, scratch_operands = 0 : i64, tpu.core_type = #tpu.core_type<tc>, window_params = [{transform_indices = @transform_0, window_bounds = array<i64: 16, 128>}, {pipeline_mode = #tpu.pipeline_mode<synchronous>, transform_indices = @transform_1, window_bounds = array<i64: 128, 128>}, {pipeline_mode = #tpu.pipeline_mode<synchronous>, transform_indices = @transform_2, window_bounds = array<i64: 1, 128>}, {pipeline_mode = #tpu.pipeline_mode<synchronous>, transform_indices = @transform_3, window_bounds = array<i64: 128, 128>}, {pipeline_mode = #tpu.pipeline_mode<synchronous>, transform_indices = @transform_4, window_bounds = array<i64: 1, 128>}, {transform_indices = @transform_5, window_bounds = array<i64: 16, 128>}]} {
    %c0 = arith.constant 0 : index
    %c0_0 = arith.constant 0 : index
    %0 = vector.load %arg1[%c0, %c0_0] : memref<16x128xf32, #tpu.memory_space<vmem>>, vector<16x128xf32>
    %1 = arith.truncf %0 : vector<16x128xf32> to vector<16x128xbf16>
    %c0_1 = arith.constant 0 : index
    %c0_2 = arith.constant 0 : index
    %2 = vector.load %arg2[%c0_1, %c0_2] : memref<128x128xbf16, #tpu.memory_space<vmem>>, vector<128x128xbf16>
    %cst = arith.constant dense<0.000000e+00> : vector<16x128xf32>
    %3 = tpu.matmul %1, %2, %cst {dimension_numbers = #tpu.dot_dimension_numbers<[1], [0], [0], [1], [0, 0, 1, 1], [], []>} : vector<16x128xbf16>, vector<128x128xbf16>, vector<16x128xf32> -> vector<16x128xf32>
    %c0_3 = arith.constant 0 : index
    %c0_4 = arith.constant 0 : index
    %4 = vector.load %arg3[%c0_3, %c0_4] : memref<1x128xf32, #tpu.memory_space<vmem>>, vector<1x128xf32>
    %5 = vector.broadcast %4 : vector<1x128xf32> to vector<16x128xf32>
    %6 = arith.addf %3, %5 : vector<16x128xf32>
    %cst_5 = arith.constant 0.000000e+00 : f32
    %7 = vector.broadcast %cst_5 : f32 to vector<16x128xf32>
    %8 = arith.maximumf %6, %7 : vector<16x128xf32>
    %9 = arith.truncf %8 : vector<16x128xf32> to vector<16x128xbf16>
    %c0_6 = arith.constant 0 : index
    %c0_7 = arith.constant 0 : index
    %10 = vector.load %arg4[%c0_6, %c0_7] : memref<128x128xbf16, #tpu.memory_space<vmem>>, vector<128x128xbf16>
    %cst_8 = arith.constant dense<0.000000e+00> : vector<16x128xf32>
    %11 = tpu.matmul %9, %10, %cst_8 {dimension_numbers = #tpu.dot_dimension_numbers<[1], [0], [0], [1], [0, 0, 1, 1], [], []>} : vector<16x128xbf16>, vector<128x128xbf16>, vector<16x128xf32> -> vector<16x128xf32>
    %c0_9 = arith.constant 0 : index
    %c0_10 = arith.constant 0 : index
    %12 = vector.load %arg5[%c0_9, %c0_10] : memref<1x128xf32, #tpu.memory_space<vmem>>, vector<1x128xf32>
    %13 = vector.broadcast %12 : vector<1x128xf32> to vector<16x128xf32>
    %14 = arith.addf %11, %13 : vector<16x128xf32>
    %cst_11 = arith.constant dense<0xFF800000> : vector<16xf32>
    %15 = vector.multi_reduction <maximumf>, %14, %cst_11 [1] : vector<16x128xf32> to vector<16xf32>
    %16 = vector.shape_cast %15 : vector<16xf32> to vector<16x1xf32>
    %17 = vector.broadcast %16 : vector<16x1xf32> to vector<16x128xf32>
    %18 = arith.subf %14, %17 : vector<16x128xf32>
    %19 = math.exp %18 : vector<16x128xf32>
    %cst_12 = arith.constant dense<0.000000e+00> : vector<16xf32>
    %20 = vector.multi_reduction <add>, %19, %cst_12 [1] : vector<16x128xf32> to vector<16xf32>
    %21 = vector.shape_cast %20 : vector<16xf32> to vector<16x1xf32>
    %22 = vector.broadcast %21 : vector<16x1xf32> to vector<16x128xf32>
    %23 = arith.divf %19, %22 : vector<16x128xf32>
    %c0_13 = arith.constant 0 : index
    %c0_14 = arith.constant 0 : index
    %24 = vector.load %arg6[%c0_13, %c0_14] : memref<16x128xf32, #tpu.memory_space<vmem>>, vector<16x128xf32>
    tpu.vector_store %arg6[%c0_13, %c0_14], %23 {strides = array<i32>} : memref<16x128xf32, #tpu.memory_space<vmem>>, vector<16x128xf32>,
    return
  }
  func.func @transform_0(%arg0: i32) -> (i32, i32) {
    %c0_i32 = arith.constant 0 : i32
    %c0_i32_0 = arith.constant 0 : i32
    return %arg0, %c0_i32 : i32, i32
  }
  func.func @transform_1(%arg0: i32) -> (i32, i32) {
    %c0_i32 = arith.constant 0 : i32
    %c0_i32_0 = arith.constant 0 : i32
    %c0_i32_1 = arith.constant 0 : i32
    return %c0_i32, %c0_i32_0 : i32, i32
  }
  func.func @transform_2(%arg0: i32) -> (i32, i32) {
    %c0_i32 = arith.constant 0 : i32
    %c0_i32_0 = arith.constant 0 : i32
    %c0_i32_1 = arith.constant 0 : i32
    return %c0_i32, %c0_i32_0 : i32, i32
  }
  func.func @transform_3(%arg0: i32) -> (i32, i32) {
    %c0_i32 = arith.constant 0 : i32
    %c0_i32_0 = arith.constant 0 : i32
    %c0_i32_1 = arith.constant 0 : i32
    return %c0_i32, %c0_i32_0 : i32, i32
  }
  func.func @transform_4(%arg0: i32) -> (i32, i32) {
    %c0_i32 = arith.constant 0 : i32
    %c0_i32_0 = arith.constant 0 : i32
    %c0_i32_1 = arith.constant 0 : i32
    return %c0_i32, %c0_i32_0 : i32, i32
  }
  func.func @transform_5(%arg0: i32) -> (i32, i32) {
    %c0_i32 = arith.constant 0 : i32
    %c0_i32_0 = arith.constant 0 : i32
    return %arg0, %c0_i32 : i32, i32
  }
}

</mosaic_0001>

<llo_original>
// kernel: tpu_custom_call.1
$region0: #{tpu_custom_call.1}
  #allocation0 [shape = 'u32[]', space=smem, size = 0x4, offset = 0x4, fixed_abs, tag = 'smem constant byte address 0x4 - core index']
  #allocation1 [shape = 'u32[144,128]{1,0:T(1,128)}', space=vmem, size = 0x12000, scoped, tag = 'internal scratch']
  %s0 = inlined_call_operand.hbm [shape: f32[16,128], index: 0, kind: input, shape index: {}]
  %s1 = inlined_call_operand.hbm [shape: bf16[128,128], index: 1, kind: input, shape index: {}]
  %s2 = inlined_call_operand.vmem [shape: f32[1,128], index: 2, kind: input, shape index: {}]
  %s3 = inlined_call_operand.hbm [shape: bf16[128,128], index: 3, kind: input, shape index: {}]
  %s4 = inlined_call_operand.vmem [shape: f32[1,128], index: 4, kind: input, shape index: {}]
  %s5 = inlined_call_operand.hbm [shape: f32[16,128], index: 5, kind: output, shape index: {}]
  %s6 = sld [smem:[#allocation0]]
  $region42: #{tpu_custom_call.1} parent=0
    _
  %s8 = ssub.s32 1, %s6
  %s9 = scalar_select 0, %s8, %s6
  $region1: #{tpu_custom_call.1} parent=0
    #allocation2 [shape = 'u8[8192]{0}', space=vmem, size = 0x2000, scoped, tag = 'input window, operand 0, single buffered']
    #allocation3 [shape = 's32[1]{0}', space=sflag, size = 0x4, scoped, tag = 'scoped memory for tpu_custom_call.1']
    #allocation4 [shape = 's32[1]{0}', space=sflag, size = 0x4, scoped, tag = 'scoped memory for tpu_custom_call.1']
    #allocation5 [shape = 'u8[32768]{0}', space=vmem, size = 0x8000, scoped, tag = 'input window, operand 1, single buffered']
    #allocation6 [shape = 's32[1]{0}', space=sflag, size = 0x4, scoped, tag = 'scoped memory for tpu_custom_call.1']
    #allocation7 [shape = 'u8[32768]{0}', space=vmem, size = 0x8000, scoped, tag = 'input window, operand 3, single buffered']
    #allocation8 [shape = 'u8[8192]{0}', space=vmem, size = 0x2000, scoped, tag = 'output window, operand 0, single buffered']
    %10 = vsyncpa [#allocation3], 0
    %11 = vsyncpa [#allocation6], 0
    %12 = vsyncpa [#allocation4], 0
    // Predicated region
    $region2: #{tpu_custom_call.1} parent=1 // pred_check
      _
    $region3: #{tpu_custom_call.1} parent=1 // pred_check_branch
      %14 = sbr.rel (0) target = $region5
    $region4: #{tpu_custom_call.1} parent=1 // pred_region
      %s16 = ssub.s32 256, 256
      %17 = vsyncadd [#allocation3], %s16
      %s18 = sshll.u32 [#allocation2], 4
      %s19 = int_to_ptr.vmem [resolvable:$true] %s18
      %24 = dma.hbm_to_vmem [thread:$0]  %s0, 256, %s19, [#allocation3], 128, 128, 8
    $region5: #{tpu_custom_call.1} parent=1 // pred_fallthru
      _
    // Predicated region
    $region6: #{tpu_custom_call.1} parent=1 // pred_check
      _
    $region7: #{tpu_custom_call.1} parent=1 // pred_check_branch
      %26 = sbr.rel (0) target = $region9
    $region8: #{tpu_custom_call.1} parent=1 // pred_region
      %s28 = ssub.s32 1024, 1024
      %29 = vsyncadd [#allocation6], %s28
      %s30 = sshll.u32 [#allocation5], 4
      %s31 = int_to_ptr.vmem [resolvable:$true] %s30
      %36 = dma.hbm_to_vmem [thread:$0]  %s1, 1024, %s31, [#allocation6], 64, 64, 4
    $region9: #{tpu_custom_call.1} parent=1 // pred_fallthru
      _
    // Predicated region
    $region10: #{tpu_custom_call.1} parent=1 // pred_check
      _
    $region11: #{tpu_custom_call.1} parent=1 // pred_check_branch
      %38 = sbr.rel (0) target = $region13
    $region12: #{tpu_custom_call.1} parent=1 // pred_region
      _
    $region13: #{tpu_custom_call.1} parent=1 // pred_fallthru
      _
    // Predicated region
    $region14: #{tpu_custom_call.1} parent=1 // pred_check
      _
    $region15: #{tpu_custom_call.1} parent=1 // pred_check_branch
      %40 = sbr.rel (0) target = $region17
    $region16: #{tpu_custom_call.1} parent=1 // pred_region
      %s42 = ssub.s32 1024, 1024
      %43 = vsyncadd [#allocation6], %s42
      %s44 = sshll.u32 [#allocation7], 4
      %s45 = int_to_ptr.vmem [resolvable:$true] %s44
      %50 = dma.hbm_to_vmem [thread:$0]  %s3, 1024, %s45, [#allocation6], 64, 64, 4
    $region17: #{tpu_custom_call.1} parent=1 // pred_fallthru
      _
    // Predicated region
    $region18: #{tpu_custom_call.1} parent=1 // pred_check
      _
    $region19: #{tpu_custom_call.1} parent=1 // pred_check_branch
      %52 = sbr.rel (0) target = $region21
    $region20: #{tpu_custom_call.1} parent=1 // pred_region
      _
    $region21: #{tpu_custom_call.1} parent=1 // pred_fallthru
      _
    // Predicated region
    $region22: #{tpu_custom_call.1} parent=1 // pred_check
      _
    $region23: #{tpu_custom_call.1} parent=1 // pred_check_branch
      %54 = sbr.rel (0) target = $region25
    $region24: #{tpu_custom_call.1} parent=1 // pred_region
      %55 = dma.done [#allocation3], 256
    $region25: #{tpu_custom_call.1} parent=1 // pred_fallthru
      _
    // Predicated region
    $region26: #{tpu_custom_call.1} parent=1 // pred_check
      _
    $region27: #{tpu_custom_call.1} parent=1 // pred_check_branch
      %57 = sbr.rel (0) target = $region29
    $region28: #{tpu_custom_call.1} parent=1 // pred_region
      %58 = dma.done [#allocation6], 1024
    $region29: #{tpu_custom_call.1} parent=1 // pred_fallthru
      _
    // Predicated region
    $region30: #{tpu_custom_call.1} parent=1 // pred_check
      _
    $region31: #{tpu_custom_call.1} parent=1 // pred_check_branch
      %60 = sbr.rel (0) target = $region33
    $region32: #{tpu_custom_call.1} parent=1 // pred_region
      %61 = dma.done [#allocation6], 1024
    $region33: #{tpu_custom_call.1} parent=1 // pred_fallthru
      _
    %v63 = vld [vmem:[#allocation2] sm:$0xff]
    %v64 = vld [vmem:[#allocation2 + $0x8] sm:$0xff]
    %v65 = vpack.c.bf16 %v64, %v63
    %v66 = vld [vmem:[#allocation5] sm:$0xf]
    %v67 = vld [vmem:[#allocation5 + $0x4] sm:$0xf]
    %v68 = vld [vmem:[#allocation5 + $0x8] sm:$0xf]
    %v69 = vld [vmem:[#allocation5 + $0xc] sm:$0xf]
    %v70 = vld [vmem:[#allocation5 + $0x10] sm:$0xf]
    %v71 = vld [vmem:[#allocation5 + $0x14] sm:$0xf]
    %v72 = vld [vmem:[#allocation5 + $0x18] sm:$0xf]
    %v73 = vld [vmem:[#allocation5 + $0x1c] sm:$0xf]
    %v74 = vld [vmem:[#allocation5 + $0x20] sm:$0xf]
    %v75 = vld [vmem:[#allocation5 + $0x24] sm:$0xf]
    %v76 = vld [vmem:[#allocation5 + $0x28] sm:$0xf]
    %v77 = vld [vmem:[#allocation5 + $0x2c] sm:$0xf]
    %v78 = vld [vmem:[#allocation5 + $0x30] sm:$0xf]
    %v79 = vld [vmem:[#allocation5 + $0x34] sm:$0xf]
    %v80 = vld [vmem:[#allocation5 + $0x38] sm:$0xf]
    %v81 = vld [vmem:[#allocation5 + $0x3c] sm:$0xf]
    %v82 = vld [vmem:[%s2] sm:$0x1]
    %v84 = vlaneseq
    %v85 = vshrl.u32 %v84, 7
    %v86 = vsub.s32 0, %v85
    %v87 = vrot.slane %v82, %v86
    %v105 = vunpack.c.l.b16 %v66
    %v106 = vunpack.c.l.b16 %v67
    %v107 = vunpack.c.l.b16 %v68
    %v108 = vunpack.c.l.b16 %v69
    %v109 = vunpack.c.l.b16 %v70
    %v110 = vunpack.c.l.b16 %v71
    %v111 = vunpack.c.l.b16 %v72
    %v112 = vunpack.c.l.b16 %v73
    %v113 = vunpack.c.l.b16 %v74
    %v114 = vunpack.c.l.b16 %v75
    %v115 = vunpack.c.l.b16 %v76
    %v116 = vunpack.c.l.b16 %v77
    %v117 = vunpack.c.l.b16 %v78
    %v118 = vunpack.c.l.b16 %v79
    %v119 = vunpack.c.l.b16 %v80
    %v120 = vunpack.c.l.b16 %v81
    %v121 = vpack.c.b16 %v106, %v105
    %v122 = vpack.c.b16 %v108, %v107
    %v123 = vpack.c.b16 %v110, %v109
    %v124 = vpack.c.b16 %v112, %v111
    %v125 = vpack.c.b16 %v114, %v113
    %v126 = vpack.c.b16 %v116, %v115
    %v127 = vpack.c.b16 %v118, %v117
    %v128 = vpack.c.b16 %v120, %v119
    %137 = vmatprep.subr.bf16.mxu0 0
    %138 = vmatpush1.bf16.msra.mxu0 %v128
    %139 = vmatprep.subr.bf16.mxu0 0
    %140 = vmatpush1.bf16.msra.mxu0 %v127
    %141 = vmatprep.subr.bf16.mxu0 0
    %142 = vmatpush1.bf16.msra.mxu0 %v126
    %143 = vmatprep.subr.bf16.mxu0 0
    %144 = vmatpush1.bf16.msra.mxu0 %v125
    %145 = vmatprep.subr.bf16.mxu0 0
    %146 = vmatpush1.bf16.msra.mxu0 %v124
    %147 = vmatprep.subr.bf16.mxu0 0
    %148 = vmatpush1.bf16.msra.mxu0 %v123
    %149 = vmatprep.subr.bf16.mxu0 0
    %150 = vmatpush1.bf16.msra.mxu0 %v122
    %151 = vmatprep.subr.bf16.mxu0 0
    %152 = vmatpush1.bf16.msra.mxu0 %v121
    %153 = vmatprep.subr.bf16.mxu0 0
    %154 = vmatpush2.bf16.msra.mxu0 0
    %155 = vmatprep.subr.bf16.mxu0 0
    %156 = vmatpush2.bf16.msra.mxu0 0
    %157 = vmatprep.subr.bf16.mxu0 0
    %158 = vmatpush2.bf16.msra.mxu0 0
    %159 = vmatprep.subr.bf16.mxu0 0
    %160 = vmatpush2.bf16.msra.mxu0 0
    %161 = vmatprep.subr.bf16.mxu0 0
    %162 = vmatpush2.bf16.msra.mxu0 0
    %163 = vmatprep.subr.bf16.mxu0 0
    %164 = vmatpush2.bf16.msra.mxu0 0
    %165 = vmatprep.subr.bf16.mxu0 0
    %166 = vmatpush2.bf16.msra.mxu0 0
    %167 = vmatprep.subr.bf16.mxu0 0
    %168 = vmatpush2.bf16.msra.mxu0 0
    %169 = vmatprep.mubr.bf16.mxu0 0
    %170 = vmatmul.mubr.bf16.gmra.mxu0 %v65
    %v171 = vpop.f32.mrf.mxu0
    %v172 = vadd.f32 %v87, %v171
    %v173 = vpop.f32.mrf.mxu0
    %v174 = vpop.f32.mrf.mxu0
    %v175 = vadd.f32 %v87, %v174
    %v176 = vpop.f32.mrf.mxu0
    %177 = vdwg.mxu0
    %v178 = vmax.f32 %v172, 0.0
    %v179 = vmax.f32 %v175, 0.0
    %v180 = vpack.c.bf16 %v179, %v178
    %v181 = vld [vmem:[#allocation7] sm:$0xf]
    %v182 = vld [vmem:[#allocation7 + $0x4] sm:$0xf]
    %v183 = vld [vmem:[#allocation7 + $0x8] sm:$0xf]
    %v184 = vld [vmem:[#allocation7 + $0xc] sm:$0xf]
    %v185 = vld [vmem:[#allocation7 + $0x10] sm:$0xf]
    %v186 = vld [vmem:[#allocation7 + $0x14] sm:$0xf]
    %v187 = vld [vmem:[#allocation7 + $0x18] sm:$0xf]
    %v188 = vld [vmem:[#allocation7 + $0x1c] sm:$0xf]
    %v189 = vld [vmem:[#allocation7 + $0x20] sm:$0xf]
    %v190 = vld [vmem:[#allocation7 + $0x24] sm:$0xf]
    %v191 = vld [vmem:[#allocation7 + $0x28] sm:$0xf]
    %v192 = vld [vmem:[#allocation7 + $0x2c] sm:$0xf]
    %v193 = vld [vmem:[#allocation7 + $0x30] sm:$0xf]
    %v194 = vld [vmem:[#allocation7 + $0x34] sm:$0xf]
    %v195 = vld [vmem:[#allocation7 + $0x38] sm:$0xf]
    %v196 = vld [vmem:[#allocation7 + $0x3c] sm:$0xf]
    %v197 = vld [vmem:[%s4] sm:$0x1]
    %v199 = vlaneseq
    %v200 = vshrl.u32 %v199, 7
    %v201 = vsub.s32 0, %v200
    %v202 = vrot.slane %v197, %v201
    %v220 = vunpack.c.l.b16 %v181
    %v221 = vunpack.c.l.b16 %v182
    %v222 = vunpack.c.l.b16 %v183
    %v223 = vunpack.c.l.b16 %v184
    %v224 = vunpack.c.l.b16 %v185
    %v225 = vunpack.c.l.b16 %v186
    %v226 = vunpack.c.l.b16 %v187
    %v227 = vunpack.c.l.b16 %v188
    %v228 = vunpack.c.l.b16 %v189
    %v229 = vunpack.c.l.b16 %v190
    %v230 = vunpack.c.l.b16 %v191
    %v231 = vunpack.c.l.b16 %v192
    %v232 = vunpack.c.l.b16 %v193
    %v233 = vunpack.c.l.b16 %v194
    %v234 = vunpack.c.l.b16 %v195
    %v235 = vunpack.c.l.b16 %v196
    %v236 = vpack.c.b16 %v221, %v220
    %v237 = vpack.c.b16 %v223, %v222
    %v238 = vpack.c.b16 %v225, %v224
    %v239 = vpack.c.b16 %v227, %v226
    %v240 = vpack.c.b16 %v229, %v228
    %v241 = vpack.c.b16 %v231, %v230
    %v242 = vpack.c.b16 %v233, %v232
    %v243 = vpack.c.b16 %v235, %v234
    %252 = vmatprep.subr.bf16.mxu0 0
    %253 = vmatpush1.bf16.msra.mxu0 %v243
    %254 = vmatprep.subr.bf16.mxu0 0
    %255 = vmatpush1.bf16.msra.mxu0 %v242
    %256 = vmatprep.subr.bf16.mxu0 0
    %257 = vmatpush1.bf16.msra.mxu0 %v241
    %258 = vmatprep.subr.bf16.mxu0 0
    %259 = vmatpush1.bf16.msra.mxu0 %v240
    %260 = vmatprep.subr.bf16.mxu0 0
    %261 = vmatpush1.bf16.msra.mxu0 %v239
    %262 = vmatprep.subr.bf16.mxu0 0
    %263 = vmatpush1.bf16.msra.mxu0 %v238
    %264 = vmatprep.subr.bf16.mxu0 0
    %265 = vmatpush1.bf16.msra.mxu0 %v237
    %266 = vmatprep.subr.bf16.mxu0 0
    %267 = vmatpush1.bf16.msra.mxu0 %v236
    %268 = vmatprep.subr.bf16.mxu0 0
    %269 = vmatpush2.bf16.msra.mxu0 0
    %270 = vmatprep.subr.bf16.mxu0 0
    %271 = vmatpush2.bf16.msra.mxu0 0
    %272 = vmatprep.subr.bf16.mxu0 0
    %273 = vmatpush2.bf16.msra.mxu0 0
    %274 = vmatprep.subr.bf16.mxu0 0
    %275 = vmatpush2.bf16.msra.mxu0 0
    %276 = vmatprep.subr.bf16.mxu0 0
    %277 = vmatpush2.bf16.msra.mxu0 0
    %278 = vmatprep.subr.bf16.mxu0 0
    %279 = vmatpush2.bf16.msra.mxu0 0
    %280 = vmatprep.subr.bf16.mxu0 0
    %281 = vmatpush2.bf16.msra.mxu0 0
    %282 = vmatprep.subr.bf16.mxu0 0
    %283 = vmatpush2.bf16.msra.mxu0 0
    %284 = vmatprep.mubr.bf16.mxu0 0
    %285 = vmatmul.mubr.bf16.gmra.mxu0 %v180
    %v286 = vpop.f32.mrf.mxu0
    %v287 = vadd.f32 %v202, %v286
    %v288 = vpop.f32.mrf.mxu0
    %v289 = vpop.f32.mrf.mxu0
    %v290 = vadd.f32 %v202, %v289
    %v291 = vpop.f32.mrf.mxu0
    %292 = vdwg.mxu0
    %293 = vmax.xlane.f32.xlu0 %v287
    %v294 = vpop.xlane.xlu0 %293
    %295 = vmax.xlane.f32.xlu0 %v290
    %v296 = vpop.xlane.xlu0 %295
    %v297 = vsub.f32 %v287, %v294
    %v298 = vsub.f32 %v290, %v296
    %v299 = vmul.f32 %v297, 1.442695
    %v300 = vpow.pop %v299
    %v301 = vmul.f32 %v298, 1.442695
    %v302 = vpow.pop %v301
    %303 = vadd.xlane.f32.xlu0 %v300
    %v304 = vpop.xlane.xlu0 %303
    %305 = vadd.xlane.f32.xlu0 %v302
    %v306 = vpop.xlane.xlu0 %305
    %v307 = vrcp.pop %v304
    %v308 = vmul.f32 %v300, %v307
    %v309 = vrcp.pop %v306
    %v310 = vmul.f32 %v302, %v309
    %311 = vst [vmem:[#allocation8] sm:$0xff] %v308
    %312 = vst [vmem:[#allocation8 + $0x8] sm:$0xff] %v310
    // Predicated region
    $region34: #{tpu_custom_call.1} parent=1 // pred_check
      _
    $region35: #{tpu_custom_call.1} parent=1 // pred_check_branch
      %314 = sbr.rel (0) target = $region37
    $region36: #{tpu_custom_call.1} parent=1 // pred_region
      %s316 = ssub.s32 256, 256
      %317 = vsyncadd [#allocation4], %s316
      %s318 = sshll.u32 [#allocation8], 4
      %s319 = int_to_ptr.vmem [resolvable:$true] %s318
      %324 = dma.vmem_to_hbm [thread:$0]  %s319, 256, %s5, [#allocation4], 128, 128, 8
    $region37: #{tpu_custom_call.1} parent=1 // pred_fallthru
      _
    // Predicated region
    $region38: #{tpu_custom_call.1} parent=1 // pred_check
      _
    $region39: #{tpu_custom_call.1} parent=1 // pred_check_branch
      %326 = sbr.rel (0) target = $region41
    $region40: #{tpu_custom_call.1} parent=1 // pred_region
      %327 = dma.done [#allocation4], 256
    $region41: #{tpu_custom_call.1} parent=1 // pred_fallthru
      _
    %328 = vsyncpa [#allocation3], 1
    %329 = vsyncpa [#allocation6], 1
    %330 = vsyncpa [#allocation4], 1

</llo_original>
